<compile_context>
chip_gen: v7x
topology: tpu7x:2x2x1
jax: 0.10.0
libtpu: 0.0.40
codegen_flags: <defaults>
</compile_context>

<pallas_src>
import jax
import jax.numpy as jnp
from jax.experimental import pallas as pl
from jax.experimental.pallas import tpu as pltpu


def _round_up(x, m):
    return ((x + m - 1) // m) * m


def _pick_tile(dim, desired, align):
    """Largest multiple of `align` that divides `dim` and is <= desired.

    `dim` is assumed to already be a multiple of `align`, so this always
    returns a valid tile and no tile-induced padding is needed.
    """
    best = align
    t = align
    limit = min(desired, dim)
    while t <= limit:
        if dim % t == 0:
            best = t
        t += align
    return best


def _make_linear_kernel(weight_resident, tk):
    def kernel(x_ref, w_ref, b_ref, o_ref):
        # x_ref: (tm, tk) compute_dtype
        # w_ref: (Dr, tn) if resident else (tk, tn), compute_dtype
        # b_ref: (1, tn)  f32
        # o_ref: (tm, tn) f32, resident across the k (reduction) axis -> accumulator
        k = pl.program_id(2)

        @pl.when(k == 0)
        def _():
            o_ref[...] = jnp.zeros_like(o_ref)

        if weight_resident:
            # The whole (Dr, tn) weight slab lives in VMEM (DMA'd once per class
            # tile); take the 128-aligned (tk, tn) sub-tile for this k step.
            k_off = pl.multiple_of(k * tk, 128)
            w_tile = w_ref[pl.ds(k_off, tk), :]
        else:
            w_tile = w_ref[...]

        o_ref[...] += jnp.dot(x_ref[...], w_tile,
                              preferred_element_type=jnp.float32)

        @pl.when(k == pl.num_programs(2) - 1)
        def _():
            # Bias added exactly once, at accumulator finalize.
            o_ref[...] += b_ref[...]

    return kernel


def multiclass_logistic_regression(
        x, weight, bias, *,
        tm=512, tn=256, tk=2048,
        compute_dtype=jnp.bfloat16,
        weight_resident_max_bytes=8 * 1024 * 1024):
    """Forward pass of nn.Linear(input_dim, num_classes): y = x @ W.T + b.

    x:      (batch, input_dim) float32
    weight: (num_classes, input_dim) float32   (PyTorch convention)
    bias:   (num_classes,) float32
    returns (batch, num_classes) float32
    """
    B, D = x.shape
    C, D2 = weight.shape
    assert D == D2 and bias.shape == (C,)

    Br = _round_up(B, 8)       # sublane-aligned batch
    Cr = _round_up(C, 128)     # lane-dense classes
    Dr = _round_up(D, 128)     # lane-aligned reduction dim

    # Tiles divide the rounded dims exactly (no tile-induced padding of x).
    tm = _pick_tile(Br, tm, 8)
    tn = _pick_tile(Cr, tn, 128)
    tk = _pick_tile(Dr, tk, 128)
    # Keep >= 2 batch blocks when possible so the "parallel" batch axis can be
    # sharded across both TensorCores of a v7x chip.
    if Br // tm < 2 and Br >= 16:
        tm = _pick_tile(Br, max(8, Br // 2), 8)

    itemsize = jnp.dtype(compute_dtype).itemsize
    # Resident means: the whole (Dr, tn) column-slab of the transposed weight is
    # held in VMEM across all batch tiles / k steps for a given class tile.
    # Budget 2x in case the block is still double-buffered.
    weight_resident = 2 * Dr * tn * itemsize <= weight_resident_max_bytes

    # One-time pad (<=7 rows / <=127 cols), cast to the streaming dtype, and
    # transpose the weight once so the kernel is a plain (tm,tk)x(tk,tn) matmul.
    # TODO(synk): avoid the small zero-pad of x with masked last tiles.
    xp = x if (Br == B and Dr == D) else jnp.pad(x, ((0, Br - B), (0, Dr - D)))
    xp = xp.astype(compute_dtype)
    wp = weight if (Cr == C and Dr == D) else jnp.pad(
        weight, ((0, Cr - C), (0, Dr - D)))
    wtp = wp.T.astype(compute_dtype)                       # (Dr, Cr)
    bp = bias if Cr == C else jnp.pad(bias, (0, Cr - C))
    bp = bp.reshape(1, Cr).astype(jnp.float32)

    # Grid order (classes, batch, reduction): class axis outermost so a resident
    # weight slab is fetched only once per class tile; reduction axis last so
    # the output block is a valid accumulator.
    n_i, n_j, n_k = Br // tm, Cr // tn, Dr // tk
    grid = (n_j, n_i, n_k)

    if weight_resident:
        w_spec = pl.BlockSpec((Dr, tn), lambda j, i, k: (0, j))
        w_bytes = Cr * Dr * itemsize                        # streamed once total
    else:
        w_spec = pl.BlockSpec((tk, tn), lambda j, i, k: (k, j))
        w_bytes = Cr * Dr * itemsize * n_i                  # re-streamed per batch tile

    out = pl.pallas_call(
        _make_linear_kernel(weight_resident, tk),
        out_shape=jax.ShapeDtypeStruct((Br, Cr), jnp.float32),
        grid_spec=pltpu.PrefetchScalarGridSpec(
            num_scalar_prefetch=0,
            grid=grid,
            in_specs=[
                pl.BlockSpec((tm, tk), lambda j, i, k: (i, k)),   # x tile
                w_spec,                                           # weight
                pl.BlockSpec((1, tn), lambda j, i, k: (0, j)),    # bias tile
            ],
            out_specs=pl.BlockSpec((tm, tn), lambda j, i, k: (i, j)),
        ),
        compiler_params=pltpu.CompilerParams(
            dimension_semantics=("parallel", "parallel", "arbitrary"),
            vmem_limit_bytes=48 * 1024 * 1024,   # safe for v7x's 64 MiB VMEM
        ),
        cost_estimate=pl.CostEstimate(
            flops=2 * Br * Dr * Cr,
            transcendentals=0,
            bytes_accessed=(Br * Dr * itemsize * n_j     # x read once per class tile
                            + w_bytes                    # weight traffic (see above)
                            + Br * Cr * 4                # output write
                            + Cr * 4 * n_i),             # bias re-reads
        ),
    )(xp, wtp, bp)

    if Br != B or Cr != C:
        out = out[:B, :C]
    return out


def _reference_check(x, weight, bias, out, compute_dtype):
    # Reference with matching numerics (inputs cast to the streaming dtype,
    # f32 accumulation), plus a looser check against the pure-f32 reference.
    ref_same = jnp.dot(x.astype(compute_dtype), weight.astype(compute_dtype).T,
                       preferred_element_type=jnp.float32) + bias
    ref_f32 = x @ weight.T + bias
    assert out.shape == ref_f32.shape
    assert jnp.allclose(out, ref_same, atol=2e-3, rtol=2e-3)
    assert jnp.allclose(out, ref_f32, atol=5e-2, rtol=5e-2)


if __name__ == "__main__":
    key = jax.random.PRNGKey(0)
    kx, kw, kb = jax.random.split(key, 3)

    # Shapes implied by the module: x (batch, input_dim), weight (num_classes, input_dim).
    batch, input_dim, num_classes = 8, 32, 8
    x = jax.random.normal(kx, (batch, input_dim), dtype=jnp.float32)
    bound = 1.0 / float(jnp.sqrt(input_dim))
    weight = jax.random.uniform(kw, (num_classes, input_dim),
                                minval=-bound, maxval=bound, dtype=jnp.float32)
    bias = jax.random.uniform(kb, (num_classes,),
                              minval=-bound, maxval=bound, dtype=jnp.float32)

    # 1) Default path: bf16 streaming, VMEM-resident weight, single grid step.
    out = jax.block_until_ready(multiclass_logistic_regression(x, weight, bias))
    _reference_check(x, weight, bias, out, jnp.bfloat16)

    # 2) Streamed-weight fallback path with multiple class and batch tiles.
    k2a, k2b, k2c = jax.random.split(jax.random.PRNGKey(1), 3)
    x2 = jax.random.normal(k2a, (64, 256), dtype=jnp.float32)
    b2 = 1.0 / float(jnp.sqrt(256))
    w2 = jax.random.uniform(k2b, (300, 256), minval=-b2, maxval=b2, dtype=jnp.float32)
    bb2 = jax.random.uniform(k2c, (300,), minval=-b2, maxval=b2, dtype=jnp.float32)
    out2 = jax.block_until_ready(
        multiclass_logistic_regression(x2, w2, bb2, weight_resident_max_bytes=0))
    _reference_check(x2, w2, bb2, out2, jnp.bfloat16)

    # 3) Resident weight with several reduction (k) steps -> exercises the
    #    in-kernel aligned pl.ds sub-tile slicing of the resident slab.
    k3a, k3b, k3c = jax.random.split(jax.random.PRNGKey(2), 3)
    x3 = jax.random.normal(k3a, (16, 512), dtype=jnp.float32)
    b3 = 1.0 / float(jnp.sqrt(512))
    w3 = jax.random.uniform(k3b, (8, 512), minval=-b3, maxval=b3, dtype=jnp.float32)
    bb3 = jax.random.uniform(k3c, (8,), minval=-b3, maxval=b3, dtype=jnp.float32)
    out3 = jax.block_until_ready(
        multiclass_logistic_regression(x3, w3, bb3, tk=128))
    _reference_check(x3, w3, bb3, out3, jnp.bfloat16)

    print("KERNEL_OK")
</pallas_src>

<mosaic_0001>
module attributes {stable_mosaic.version = 11 : i64} {
  func.func @kernel(%arg0: i32, %arg1: i32, %arg2: i32, %arg3: memref<8x128xbf16, #tpu.memory_space<vmem>>, %arg4: memref<128x128xbf16, #tpu.memory_space<vmem>>, %arg5: memref<1x128xf32, #tpu.memory_space<vmem>>, %arg6: memref<8x128xf32, #tpu.memory_space<vmem>>) attributes {dimension_semantics = [#tpu.dimension_semantics<parallel>, #tpu.dimension_semantics<parallel>, #tpu.dimension_semantics<arbitrary>], iteration_bounds = array<i64: 1, 1, 1>, scalar_prefetch = 0 : i64, scratch_operands = 0 : i64, tpu.core_type = #tpu.core_type<tc>, window_params = [{transform_indices = @transform_0, window_bounds = array<i64: 8, 128>}, {transform_indices = @transform_1, window_bounds = array<i64: 128, 128>}, {transform_indices = @transform_2, window_bounds = array<i64: 1, 128>}, {transform_indices = @transform_3, window_bounds = array<i64: 8, 128>}]} {
    %c0_i32 = arith.constant 0 : i32
    %0 = arith.cmpi eq, %arg2, %c0_i32 : i32
    %1 = arith.extui %0 : i1 to i32
    %c0_i32_0 = arith.constant 0 : i32
    %2 = arith.cmpi ne, %1, %c0_i32_0 : i32
    scf.if %2 {
      %cst_9 = arith.constant 0.000000e+00 : f32
      %15 = vector.broadcast %cst_9 : f32 to vector<8x128xf32>
      %c0_10 = arith.constant 0 : index
      %c0_11 = arith.constant 0 : index
      %16 = vector.load %arg6[%c0_10, %c0_11] : memref<8x128xf32, #tpu.memory_space<vmem>>, vector<8x128xf32>
      tpu.vector_store %arg6[%c0_10, %c0_11], %15 {strides = array<i32>} : memref<8x128xf32, #tpu.memory_space<vmem>>, vector<8x128xf32>,
    } else {
    }
    %c128_i32 = arith.constant 128 : i32
    %3 = arith.muli %arg2, %c128_i32 : i32
    %4 = tpu.assume_multiple %3, 128 : i32
    %5 = arith.index_cast %4 : i32 to index
    %c0 = arith.constant 0 : index
    %6 = vector.load %arg4[%5, %c0] : memref<128x128xbf16, #tpu.memory_space<vmem>>, vector<128x128xbf16>
    %c0_1 = arith.constant 0 : index
    %c0_2 = arith.constant 0 : index
    %7 = vector.load %arg6[%c0_1, %c0_2] : memref<8x128xf32, #tpu.memory_space<vmem>>, vector<8x128xf32>
    %c0_3 = arith.constant 0 : index
    %c0_4 = arith.constant 0 : index
    %8 = vector.load %arg3[%c0_3, %c0_4] : memref<8x128xbf16, #tpu.memory_space<vmem>>, vector<8x128xbf16>
    %cst = arith.constant dense<0.000000e+00> : vector<8x128xf32>
    %9 = tpu.matmul %8, %6, %cst {dimension_numbers = #tpu.dot_dimension_numbers<[1], [0], [0], [1], [0, 0, 1, 1], [], []>} : vector<8x128xbf16>, vector<128x128xbf16>, vector<8x128xf32> -> vector<8x128xf32>
    %10 = arith.addf %7, %9 : vector<8x128xf32>
    %c0_5 = arith.constant 0 : index
    %c0_6 = arith.constant 0 : index
    %11 = vector.load %arg6[%c0_5, %c0_6] : memref<8x128xf32, #tpu.memory_space<vmem>>, vector<8x128xf32>
    tpu.vector_store %arg6[%c0_5, %c0_6], %10 {strides = array<i32>} : memref<8x128xf32, #tpu.memory_space<vmem>>, vector<8x128xf32>,
    %c0_i32_7 = arith.constant 0 : i32
    %12 = arith.cmpi eq, %arg2, %c0_i32_7 : i32
    %13 = arith.extui %12 : i1 to i32
    %c0_i32_8 = arith.constant 0 : i32
    %14 = arith.cmpi ne, %13, %c0_i32_8 : i32
    scf.if %14 {
      %c0_9 = arith.constant 0 : index
      %c0_10 = arith.constant 0 : index
      %15 = vector.load %arg6[%c0_9, %c0_10] : memref<8x128xf32, #tpu.memory_space<vmem>>, vector<8x128xf32>
      %c0_11 = arith.constant 0 : index
      %c0_12 = arith.constant 0 : index
      %16 = vector.load %arg5[%c0_11, %c0_12] : memref<1x128xf32, #tpu.memory_space<vmem>>, vector<1x128xf32>
      %17 = vector.broadcast %16 : vector<1x128xf32> to vector<8x128xf32>
      %18 = arith.addf %15, %17 : vector<8x128xf32>
      %c0_13 = arith.constant 0 : index
      %c0_14 = arith.constant 0 : index
      %19 = vector.load %arg6[%c0_13, %c0_14] : memref<8x128xf32, #tpu.memory_space<vmem>>, vector<8x128xf32>
      tpu.vector_store %arg6[%c0_13, %c0_14], %18 {strides = array<i32>} : memref<8x128xf32, #tpu.memory_space<vmem>>, vector<8x128xf32>,
    } else {
    }
    return
  }
  func.func @transform_0(%arg0: i32, %arg1: i32, %arg2: i32) -> (i32, i32) {
    %c0_i32 = arith.constant 0 : i32
    return %arg1, %arg2 : i32, i32
  }
  func.func @transform_1(%arg0: i32, %arg1: i32, %arg2: i32) -> (i32, i32) {
    %c0_i32 = arith.constant 0 : i32
    %c0_i32_0 = arith.constant 0 : i32
    return %c0_i32, %arg0 : i32, i32
  }
  func.func @transform_2(%arg0: i32, %arg1: i32, %arg2: i32) -> (i32, i32) {
    %c0_i32 = arith.constant 0 : i32
    %c0_i32_0 = arith.constant 0 : i32
    return %c0_i32, %arg0 : i32, i32
  }
  func.func @transform_3(%arg0: i32, %arg1: i32, %arg2: i32) -> (i32, i32) {
    %c0_i32 = arith.constant 0 : i32
    return %arg1, %arg0 : i32, i32
  }
}

</mosaic_0001>

<llo_original>
// kernel: tpu_custom_call.1
$region0: #{tpu_custom_call.1}
  #allocation0 [shape = 'u32[]', space=smem, size = 0x4, offset = 0x4, fixed_abs, tag = 'smem constant byte address 0x4 - core index']
  #allocation1 [shape = 'u32[144,128]{1,0:T(1,128)}', space=vmem, size = 0x12000, scoped, tag = 'internal scratch']
  %s0 = inlined_call_operand.hbm [shape: bf16[8,128], index: 0, kind: input, shape index: {}]
  %s1 = inlined_call_operand.hbm [shape: bf16[128,128], index: 1, kind: input, shape index: {}]
  %s2 = inlined_call_operand.vmem [shape: f32[1,128], index: 2, kind: input, shape index: {}]
  %s3 = inlined_call_operand.hbm [shape: f32[8,128], index: 3, kind: output, shape index: {}]
  %s4 = sld [smem:[#allocation0]]
  $region38: #{tpu_custom_call.1} parent=0
    _
  %s6 = ssub.s32 1, %s4
  %s7 = scalar_select 0, %s6, %s4
  $region1: #{tpu_custom_call.1} parent=0
    #allocation2 [shape = 'u8[2048]{0}', space=vmem, size = 0x800, scoped, tag = 'input window, operand 0, single buffered']
    #allocation3 [shape = 's32[1]{0}', space=sflag, size = 0x4, scoped, tag = 'scoped memory for tpu_custom_call.1']
    #allocation4 [shape = 's32[1]{0}', space=sflag, size = 0x4, scoped, tag = 'scoped memory for tpu_custom_call.1']
    #allocation5 [shape = 'u8[32768]{0}', space=vmem, size = 0x8000, scoped, tag = 'input window, operand 1, single buffered']
    #allocation6 [shape = 's32[1]{0}', space=sflag, size = 0x4, scoped, tag = 'scoped memory for tpu_custom_call.1']
    #allocation7 [shape = 'u8[4096]{0}', space=vmem, size = 0x1000, scoped, tag = 'output window, operand 0, single buffered']
    %8 = vsyncpa [#allocation3], 0
    %9 = vsyncpa [#allocation6], 0
    %10 = vsyncpa [#allocation4], 0
    // Predicated region
    $region2: #{tpu_custom_call.1} parent=1 // pred_check
      _
    $region3: #{tpu_custom_call.1} parent=1 // pred_check_branch
      %12 = sbr.rel (0) target = $region5
    $region4: #{tpu_custom_call.1} parent=1 // pred_region
      %s14 = ssub.s32 64, 64
      %15 = vsyncadd [#allocation3], %s14
      %s17 = sshll.u32 [#allocation2], 4
      %s18 = int_to_ptr.vmem [resolvable:$true] %s17
      %20 = dma.hbm_to_vmem [thread:$0]  %s0, 64, %s18, [#allocation3]
    $region5: #{tpu_custom_call.1} parent=1 // pred_fallthru
      _
    // Predicated region
    $region6: #{tpu_custom_call.1} parent=1 // pred_check
      _
    $region7: #{tpu_custom_call.1} parent=1 // pred_check_branch
      %22 = sbr.rel (0) target = $region9
    $region8: #{tpu_custom_call.1} parent=1 // pred_region
      %s24 = ssub.s32 1024, 1024
      %25 = vsyncadd [#allocation6], %s24
      %s26 = sshll.u32 [#allocation5], 4
      %s27 = int_to_ptr.vmem [resolvable:$true] %s26
      %32 = dma.hbm_to_vmem [thread:$0]  %s1, 1024, %s27, [#allocation6], 64, 64, 4
    $region9: #{tpu_custom_call.1} parent=1 // pred_fallthru
      _
    // Predicated region
    $region10: #{tpu_custom_call.1} parent=1 // pred_check
      _
    $region11: #{tpu_custom_call.1} parent=1 // pred_check_branch
      %34 = sbr.rel (0) target = $region13
    $region12: #{tpu_custom_call.1} parent=1 // pred_region
      _
    $region13: #{tpu_custom_call.1} parent=1 // pred_fallthru
      _
    // Predicated region
    $region14: #{tpu_custom_call.1} parent=1 // pred_check
      _
    $region15: #{tpu_custom_call.1} parent=1 // pred_check_branch
      %36 = sbr.rel (0) target = $region17
    $region16: #{tpu_custom_call.1} parent=1 // pred_region
      %37 = dma.done [#allocation3], 64
    $region17: #{tpu_custom_call.1} parent=1 // pred_fallthru
      _
    // Predicated region
    $region18: #{tpu_custom_call.1} parent=1 // pred_check
      _
    $region19: #{tpu_custom_call.1} parent=1 // pred_check_branch
      %39 = sbr.rel (0) target = $region21
    $region20: #{tpu_custom_call.1} parent=1 // pred_region
      %40 = dma.done [#allocation6], 1024
    $region21: #{tpu_custom_call.1} parent=1 // pred_fallthru
      _
    %p42 = scmp.eq.s32.totalorder 0, 0
    // Predicated region
    $region22: #{tpu_custom_call.1} parent=1 // pred_check
      %p43 = pneg %p42
    $region23: #{tpu_custom_call.1} parent=1 // pred_check_branch
      %45 = sbr.rel (%p43) target = $region25
    $region24: #{tpu_custom_call.1} parent=1 // pred_region
      %46 = vst [vmem:[#allocation7] sm:$0xff] 0.0
    $region25: #{tpu_custom_call.1} parent=1 // pred_fallthru
      _
    %s47 = smul.u32 0, 128
    %s48 = sshra.s32 %s47, 3
    %s49 = sand.u32 %s47, 7
    %s50 = smul.addr %s48, 4
    %s51 = scalar_lea.vmem [#allocation5], %s50
    %v52 = vld [vmem:[%s51] sm:$0xf]
    %v53 = vld [vmem:[%s51 + $0x4] sm:$0xf]
    %v54 = vld [vmem:[%s51 + $0x8] sm:$0xf]
    %v55 = vld [vmem:[%s51 + $0xc] sm:$0xf]
    %v56 = vld [vmem:[%s51 + $0x10] sm:$0xf]
    %v57 = vld [vmem:[%s51 + $0x14] sm:$0xf]
    %v58 = vld [vmem:[%s51 + $0x18] sm:$0xf]
    %v59 = vld [vmem:[%s51 + $0x1c] sm:$0xf]
    %v60 = vld [vmem:[%s51 + $0x20] sm:$0xf]
    %v61 = vld [vmem:[%s51 + $0x24] sm:$0xf]
    %v62 = vld [vmem:[%s51 + $0x28] sm:$0xf]
    %v63 = vld [vmem:[%s51 + $0x2c] sm:$0xf]
    %v64 = vld [vmem:[%s51 + $0x30] sm:$0xf]
    %v65 = vld [vmem:[%s51 + $0x34] sm:$0xf]
    %v66 = vld [vmem:[%s51 + $0x38] sm:$0xf]
    %v67 = vld [vmem:[%s51 + $0x3c] sm:$0xf]
    %v68 = vld [vmem:[#allocation7] sm:$0xff]
    %v69 = vld [vmem:[#allocation2] sm:$0xf]
    %v86 = vunpack.c.l.b16 %v52
    %v87 = vunpack.c.l.b16 %v53
    %v88 = vunpack.c.l.b16 %v54
    %v89 = vunpack.c.l.b16 %v55
    %v90 = vunpack.c.l.b16 %v56
    %v91 = vunpack.c.l.b16 %v57
    %v92 = vunpack.c.l.b16 %v58
    %v93 = vunpack.c.l.b16 %v59
    %v94 = vunpack.c.l.b16 %v60
    %v95 = vunpack.c.l.b16 %v61
    %v96 = vunpack.c.l.b16 %v62
    %v97 = vunpack.c.l.b16 %v63
    %v98 = vunpack.c.l.b16 %v64
    %v99 = vunpack.c.l.b16 %v65
    %v100 = vunpack.c.l.b16 %v66
    %v101 = vunpack.c.l.b16 %v67
    %v102 = vpack.c.b16 %v87, %v86
    %v103 = vpack.c.b16 %v89, %v88
    %v104 = vpack.c.b16 %v91, %v90
    %v105 = vpack.c.b16 %v93, %v92
    %v106 = vpack.c.b16 %v95, %v94
    %v107 = vpack.c.b16 %v97, %v96
    %v108 = vpack.c.b16 %v99, %v98
    %v109 = vpack.c.b16 %v101, %v100
    %118 = vmatprep.subr.bf16.mxu0 0
    %119 = vmatpush1.bf16.msra.mxu0 %v102
    %120 = vmatprep.subr.bf16.mxu0 0
    %121 = vmatpush1.bf16.msra.mxu0 %v103
    %122 = vmatprep.subr.bf16.mxu0 0
    %123 = vmatpush1.bf16.msra.mxu0 %v104
    %124 = vmatprep.subr.bf16.mxu0 0
    %125 = vmatpush1.bf16.msra.mxu0 %v105
    %126 = vmatprep.subr.bf16.mxu0 0
    %127 = vmatpush1.bf16.msra.mxu0 %v106
    %128 = vmatprep.subr.bf16.mxu0 0
    %129 = vmatpush1.bf16.msra.mxu0 %v107
    %130 = vmatprep.subr.bf16.mxu0 0
    %131 = vmatpush1.bf16.msra.mxu0 %v108
    %132 = vmatprep.subr.bf16.mxu0 0
    %133 = vmatpush1.bf16.msra.mxu0 %v109
    %134 = vmatprep.subr.bf16.mxu0 0
    %135 = vmatpush1.bf16.msra.mxu0 0
    %136 = vmatprep.subr.bf16.mxu0 0
    %137 = vmatpush1.bf16.msra.mxu0 0
    %138 = vmatprep.subr.bf16.mxu0 0
    %139 = vmatpush1.bf16.msra.mxu0 0
    %140 = vmatprep.subr.bf16.mxu0 0
    %141 = vmatpush1.bf16.msra.mxu0 0
    %142 = vmatprep.subr.bf16.mxu0 0
    %143 = vmatpush1.bf16.msra.mxu0 0
    %144 = vmatprep.subr.bf16.mxu0 0
    %145 = vmatpush1.bf16.msra.mxu0 0
    %146 = vmatprep.subr.bf16.mxu0 0
    %147 = vmatpush1.bf16.msra.mxu0 0
    %148 = vmatprep.subr.bf16.mxu0 0
    %149 = vmatpush1.bf16.msra.mxu0 0
    %150 = vmatprep.mubr.bf16.mxu0 0
    %151 = vmatmul.mubr.bf16.gmra.mrb[0].mxu0 %v69
    %v152 = vpop.f32.mrb[0].mxu0
    %v153 = vadd.f32 0.0, %v152
    %v154 = vpop.f32.mrb[0].mxu0
    %v155 = vpop.f32.mrb[0].mxu0
    %v156 = vpop.f32.mrb[0].mxu0
    %157 = vdwg.mxu0
    %v158 = vadd.f32 %v68, %v153
    %159 = vst [vmem:[#allocation7] sm:$0xff] %v158
    // Predicated region
    $region26: #{tpu_custom_call.1} parent=1 // pred_check
      %p160 = pneg %p42
    $region27: #{tpu_custom_call.1} parent=1 // pred_check_branch
      %162 = sbr.rel (%p160) target = $region29
    $region28: #{tpu_custom_call.1} parent=1 // pred_region
      %v163 = vld [vmem:[#allocation7] sm:$0xff]
      %v164 = vld [vmem:[%s2] sm:$0x1]
      %v166 = vlaneseq
      %v167 = vshrl.u32 %v166, 7
      %v168 = vsub.s32 0, %v167
      %v169 = vrot.slane %v164, %v168
      %v171 = vadd.f32 %v163, %v169
      %172 = vst [vmem:[#allocation7] sm:$0xff] %v171
    $region29: #{tpu_custom_call.1} parent=1 // pred_fallthru
      _
    // Predicated region
    $region30: #{tpu_custom_call.1} parent=1 // pred_check
      _
    $region31: #{tpu_custom_call.1} parent=1 // pred_check_branch
      %174 = sbr.rel (0) target = $region33
    $region32: #{tpu_custom_call.1} parent=1 // pred_region
      %s176 = ssub.s32 128, 128
      %177 = vsyncadd [#allocation4], %s176
      %s179 = sshll.u32 [#allocation7], 4
      %s180 = int_to_ptr.vmem [resolvable:$true] %s179
      %182 = dma.vmem_to_hbm [thread:$0]  %s180, 128, %s3, [#allocation4]
    $region33: #{tpu_custom_call.1} parent=1 // pred_fallthru
      _
    // Predicated region
    $region34: #{tpu_custom_call.1} parent=1 // pred_check
      _
    $region35: #{tpu_custom_call.1} parent=1 // pred_check_branch
      %184 = sbr.rel (0) target = $region37
    $region36: #{tpu_custom_call.1} parent=1 // pred_region
      %185 = dma.done [#allocation4], 128
    $region37: #{tpu_custom_call.1} parent=1 // pred_fallthru
      _
    %186 = vsyncpa [#allocation3], 1
    %187 = vsyncpa [#allocation6], 1
    %188 = vsyncpa [#allocation4], 1

</llo_original>
